<compile_context>
chip_gen: v7x
topology: tpu7x:2x2x1
jax: 0.10.0
libtpu: 0.0.40
codegen_flags: <defaults>
</compile_context>

<pallas_src>
import jax
import jax.numpy as jnp
from jax.experimental import pallas as pl
from jax.experimental.pallas import tpu as pltpu


def channel_attention_kernel(w1_ref, w2_ref, x_ref, o_ref):
    Bt, C, HW = x_ref.shape          # static block shape
    C_red = w1_ref.shape[0]

    # Global avg / max pool over the spatial (lane) axis; keepdims keeps C on
    # sublanes. x_ref is re-indexed per use (VMEM re-loads are ~free, keeps
    # vreg live ranges short once blocks are large).
    avg = jnp.mean(x_ref[...], axis=-1, keepdims=True)           # (Bt, C, 1)
    mx = jnp.max(x_ref[...], axis=-1, keepdims=True)             # (Bt, C, 1)

    # Stack both branches on the lane axis so the shared MLP runs once.
    # Built with a broadcasted select (robust lowering) instead of a lane-dim
    # concatenate of width-1 operands.
    branch = jax.lax.broadcasted_iota(jnp.int32, (Bt, C, 2), 2)
    p = jnp.where(branch == 0, avg, mx)                           # (Bt, C, 2)

    w1 = w1_ref[...]                                              # (C_red, C)
    w2 = w2_ref[...]                                              # (C, C_red)

    if C >= 256 or C_red >= 8:
        # MXU path for non-toy channel counts (not exercised by the toy test
        # shape): contraction over C via dot_general.
        h = jax.lax.dot_general(p, w1, (((1,), (1,)), ((), ())),
                                preferred_element_type=jnp.float32)      # (Bt, 2, C_red)
        h = jnp.maximum(h, 0.0)
        logits = jax.lax.dot_general(h, w2, (((2,), (1,)), ((), ())),
                                     preferred_element_type=jnp.float32)  # (Bt, 2, C)
        # Sum branches; one small lane->sublane relayout before the broadcast.
        attn = jax.nn.sigmoid(jnp.sum(logits, axis=1))[:, :, None]        # (Bt, C, 1)
    else:
        # VPU path for tiny C / C_red: broadcast-multiply + sublane reduction,
        # channels stay on the sublane axis end-to-end (no relayout at all).
        h = jnp.sum(w1[None, :, :, None] * p[:, None, :, :], axis=2)      # (Bt, C_red, 2)
        h = jnp.maximum(h, 0.0)
        logits = jnp.sum(w2[None, :, :, None] * h[:, None, :, :], axis=2)  # (Bt, C, 2)
        attn = jax.nn.sigmoid(jnp.sum(logits, axis=-1, keepdims=True))     # (Bt, C, 1)

    # Lane-dense store; attn broadcasts over the HW lane axis, no relayout.
    o_ref[...] = x_ref[...] * attn


def _choose_bt(B, C, HW, *, vmem_limit_bytes, weight_bytes, dtype_bytes=4, min_steps=4):
    """Batch-block size: largest divisor of B that (a) keeps >= min_steps grid
    steps (pipelining / both v7x TCs) and (b) fits the VMEM budget with the
    input and output blocks each double-buffered."""
    per_b = C * HW * dtype_bytes
    budget = vmem_limit_bytes - 2 * weight_bytes - (4 << 20)   # weights double-buffered + headroom
    max_bt_vmem = max(1, budget // (4 * per_b))                # x and out, 2 buffers each
    max_bt_steps = max(1, B // min_steps)                      # keep the pipeline full
    bt = int(max(1, min(B, max_bt_vmem, max_bt_steps)))
    while B % bt:                                              # exact grid, no partial blocks
        bt -= 1
    return bt


def channel_attention(x_nchw, w1, w2, *, min_steps=4):
    """x_nchw: (B, C, H, W) f32; w1: (C//r, C); w2: (C, C//r)."""
    B, C, H, W = x_nchw.shape
    HW = H * W
    x = x_nchw.reshape(B, C, HW)   # C -> sublanes, H*W -> lanes (lane-dense when HW % 128 == 0)
    # TODO(synk): if HW is not a multiple of 128 the kernel is still correct but uses
    # masked stores; pad HW (or fold C into lanes) host-side before shipping as a general op.

    # Per-generation VMEM budget: ~75% of physical (96 MiB v5e/v6e, 48 MiB v7x).
    try:
        vmem_cap = pltpu.get_tpu_info().vmem_capacity_bytes
    except Exception:
        vmem_cap = 64 * 1024 * 1024            # conservative (v7x-sized) fallback
    vmem_limit = int(max(min(vmem_cap * 3 // 4, 96 * 1024 * 1024), 32 * 1024 * 1024))

    weight_bytes = int((w1.size + w2.size) * w1.dtype.itemsize)
    Bt = _choose_bt(B, C, HW, vmem_limit_bytes=vmem_limit, weight_bytes=weight_bytes,
                    dtype_bytes=x.dtype.itemsize, min_steps=min_steps)
    grid = (B // Bt,)
    # TODO(synk): if a single batch element (4 * C*HW*4 bytes) exceeds the VMEM budget,
    # switch to a two-pass HW-tiled grid (pass 1 accumulates sum/max, pass 2 scales).

    out = pl.pallas_call(
        channel_attention_kernel,
        out_shape=jax.ShapeDtypeStruct((B, C, HW), x.dtype),
        grid_spec=pltpu.PrefetchScalarGridSpec(
            num_scalar_prefetch=0,
            grid=grid,
            in_specs=[
                pl.BlockSpec(w1.shape, lambda i: (0, 0)),        # full weight
                pl.BlockSpec(w2.shape, lambda i: (0, 0)),        # full weight
                pl.BlockSpec((Bt, C, HW), lambda i: (i, 0, 0)),  # Bt batch elems
            ],
            out_specs=pl.BlockSpec((Bt, C, HW), lambda i: (i, 0, 0)),
        ),
        compiler_params=pltpu.CompilerParams(
            dimension_semantics=("parallel",),   # batch steps shard across v7x's 2 TCs
            vmem_limit_bytes=vmem_limit,
        ),
    )(w1, w2, x)

    return out.reshape(B, C, H, W)


def channel_attention_ref(x, w1, w2):
    # Pure-JAX reference mirroring the PyTorch forward.
    avg = jnp.mean(x, axis=(2, 3), keepdims=True)            # (B, C, 1, 1)
    mx = jnp.max(x, axis=(2, 3), keepdims=True)              # (B, C, 1, 1)

    def mlp(p):  # p: (B, C, 1, 1)
        p = p[:, :, 0, 0]                                    # (B, C)
        h = jnp.maximum(p @ w1.T, 0.0)                       # (B, C_red)
        return (h @ w2.T)[:, :, None, None]                  # (B, C, 1, 1)

    out = mlp(avg) + mlp(mx)
    return x * jax.nn.sigmoid(out)


if __name__ == "__main__":
    key = jax.random.PRNGKey(0)
    B, C, H, W = 2, 32, 16, 16
    reduction = 16
    C_red = C // reduction

    k_x, k_w1, k_w2 = jax.random.split(key, 3)
    x = jax.random.normal(k_x, (B, C, H, W), dtype=jnp.float32)
    # Deterministic synthetic weights (conv 1x1, no bias): (out_c, in_c)
    w1 = jax.random.normal(k_w1, (C_red, C), dtype=jnp.float32) * (1.0 / C) ** 0.5
    w2 = jax.random.normal(k_w2, (C, C_red), dtype=jnp.float32) * (1.0 / C_red) ** 0.5

    y = channel_attention(x, w1, w2)
    jax.block_until_ready(y)

    y_ref = channel_attention_ref(x, w1, w2)
    assert jnp.allclose(y, y_ref, atol=1e-5, rtol=1e-5), "mismatch vs reference"

    print("KERNEL_OK")
</pallas_src>

<mosaic_0001>
module attributes {stable_mosaic.version = 11 : i64} {
  func.func @channel_attention_kernel(%arg0: i32, %arg1: memref<2x32xf32, #tpu.memory_space<vmem>>, %arg2: memref<32x2xf32, #tpu.memory_space<vmem>>, %arg3: memref<1x32x256xf32, #tpu.memory_space<vmem>>, %arg4: memref<1x32x256xf32, #tpu.memory_space<vmem>>) attributes {dimension_semantics = [#tpu.dimension_semantics<parallel>], iteration_bounds = array<i64: 2>, scalar_prefetch = 0 : i64, scratch_operands = 0 : i64, tpu.core_type = #tpu.core_type<tc>, window_params = [{pipeline_mode = #tpu.pipeline_mode<synchronous>, transform_indices = @transform_0, window_bounds = array<i64: 2, 32>}, {pipeline_mode = #tpu.pipeline_mode<synchronous>, transform_indices = @transform_1, window_bounds = array<i64: 32, 2>}, {transform_indices = @transform_2, window_bounds = array<i64: 1, 32, 256>}, {transform_indices = @transform_3, window_bounds = array<i64: 1, 32, 256>}]} {
    %c0 = arith.constant 0 : index
    %c0_0 = arith.constant 0 : index
    %c0_1 = arith.constant 0 : index
    %0 = vector.load %arg3[%c0, %c0_0, %c0_1] : memref<1x32x256xf32, #tpu.memory_space<vmem>>, vector<1x32x256xf32>
    %cst = arith.constant dense<0.000000e+00> : vector<1x32xf32>
    %1 = vector.multi_reduction <add>, %0, %cst [2] : vector<1x32x256xf32> to vector<1x32xf32>
    %2 = vector.shape_cast %1 : vector<1x32xf32> to vector<1x32x1xf32>
    %cst_2 = arith.constant 2.560000e+02 : f32
    %3 = vector.broadcast %cst_2 : f32 to vector<1x32x1xf32>
    %4 = arith.divf %2, %3 : vector<1x32x1xf32>
    %c0_3 = arith.constant 0 : index
    %c0_4 = arith.constant 0 : index
    %c0_5 = arith.constant 0 : index
    %5 = vector.load %arg3[%c0_3, %c0_4, %c0_5] : memref<1x32x256xf32, #tpu.memory_space<vmem>>, vector<1x32x256xf32>
    %cst_6 = arith.constant dense<0xFF800000> : vector<1x32xf32>
    %6 = vector.multi_reduction <maximumf>, %5, %cst_6 [2] : vector<1x32x256xf32> to vector<1x32xf32>
    %7 = vector.shape_cast %6 : vector<1x32xf32> to vector<1x32x1xf32>
    %8 = tpu.iota {dimensions = array<i32: 2>} : vector<1x32x2xi32>
    %c0_i32 = arith.constant 0 : i32
    %9 = vector.broadcast %c0_i32 : i32 to vector<1x32x2xi32>
    %10 = arith.cmpi eq, %8, %9 : vector<1x32x2xi32>
    %11 = vector.shape_cast %4 : vector<1x32x1xf32> to vector<1x32x1xf32>
    %12 = vector.broadcast %11 : vector<1x32x1xf32> to vector<1x32x2xf32>
    %13 = vector.shape_cast %7 : vector<1x32x1xf32> to vector<1x32x1xf32>
    %14 = vector.broadcast %13 : vector<1x32x1xf32> to vector<1x32x2xf32>
    %15 = arith.select %10, %12, %14 : vector<1x32x2xi1>, vector<1x32x2xf32>
    %c0_7 = arith.constant 0 : index
    %c0_8 = arith.constant 0 : index
    %16 = vector.load %arg1[%c0_7, %c0_8] : memref<2x32xf32, #tpu.memory_space<vmem>>, vector<2x32xf32>
    %c0_9 = arith.constant 0 : index
    %c0_10 = arith.constant 0 : index
    %17 = vector.load %arg2[%c0_9, %c0_10] : memref<32x2xf32, #tpu.memory_space<vmem>>, vector<32x2xf32>
    %18 = vector.shape_cast %16 : vector<2x32xf32> to vector<1x2x32x1xf32>
    %19 = vector.shape_cast %15 : vector<1x32x2xf32> to vector<1x1x32x2xf32>
    %20 = vector.broadcast %18 : vector<1x2x32x1xf32> to vector<1x2x32x2xf32>
    %21 = vector.broadcast %19 : vector<1x1x32x2xf32> to vector<1x2x32x2xf32>
    %22 = arith.mulf %20, %21 : vector<1x2x32x2xf32>
    %cst_11 = arith.constant dense<0.000000e+00> : vector<1x2x2xf32>
    %23 = vector.multi_reduction <add>, %22, %cst_11 [2] : vector<1x2x32x2xf32> to vector<1x2x2xf32>
    %cst_12 = arith.constant 0.000000e+00 : f32
    %24 = vector.broadcast %cst_12 : f32 to vector<1x2x2xf32>
    %25 = arith.maximumf %23, %24 : vector<1x2x2xf32>
    %26 = vector.shape_cast %17 : vector<32x2xf32> to vector<1x32x2x1xf32>
    %27 = vector.shape_cast %25 : vector<1x2x2xf32> to vector<1x1x2x2xf32>
    %28 = vector.broadcast %26 : vector<1x32x2x1xf32> to vector<1x32x2x2xf32>
    %29 = vector.broadcast %27 : vector<1x1x2x2xf32> to vector<1x32x2x2xf32>
    %30 = arith.mulf %28, %29 : vector<1x32x2x2xf32>
    %cst_13 = arith.constant dense<0.000000e+00> : vector<1x32x2xf32>
    %31 = vector.multi_reduction <add>, %30, %cst_13 [2] : vector<1x32x2x2xf32> to vector<1x32x2xf32>
    %cst_14 = arith.constant dense<0.000000e+00> : vector<1x32xf32>
    %32 = vector.multi_reduction <add>, %31, %cst_14 [2] : vector<1x32x2xf32> to vector<1x32xf32>
    %33 = vector.shape_cast %32 : vector<1x32xf32> to vector<1x32x1xf32>
    %34 = arith.negf %33 : vector<1x32x1xf32>
    %35 = math.exp %34 : vector<1x32x1xf32>
    %cst_15 = arith.constant 1.000000e+00 : f32
    %36 = vector.broadcast %cst_15 : f32 to vector<1x32x1xf32>
    %37 = arith.addf %36, %35 : vector<1x32x1xf32>
    %38 = arith.divf %36, %37 : vector<1x32x1xf32>
    %c0_16 = arith.constant 0 : index
    %c0_17 = arith.constant 0 : index
    %c0_18 = arith.constant 0 : index
    %39 = vector.load %arg3[%c0_16, %c0_17, %c0_18] : memref<1x32x256xf32, #tpu.memory_space<vmem>>, vector<1x32x256xf32>
    %40 = vector.broadcast %38 : vector<1x32x1xf32> to vector<1x32x256xf32>
    %41 = arith.mulf %39, %40 : vector<1x32x256xf32>
    %c0_19 = arith.constant 0 : index
    %c0_20 = arith.constant 0 : index
    %c0_21 = arith.constant 0 : index
    %42 = vector.load %arg4[%c0_19, %c0_20, %c0_21] : memref<1x32x256xf32, #tpu.memory_space<vmem>>, vector<1x32x256xf32>
    tpu.vector_store %arg4[%c0_19, %c0_20, %c0_21], %41 {strides = array<i32>} : memref<1x32x256xf32, #tpu.memory_space<vmem>>, vector<1x32x256xf32>,
    return
  }
  func.func @transform_0(%arg0: i32) -> (i32, i32) {
    %c0_i32 = arith.constant 0 : i32
    %c0_i32_0 = arith.constant 0 : i32
    %c0_i32_1 = arith.constant 0 : i32
    return %c0_i32, %c0_i32_0 : i32, i32
  }
  func.func @transform_1(%arg0: i32) -> (i32, i32) {
    %c0_i32 = arith.constant 0 : i32
    %c0_i32_0 = arith.constant 0 : i32
    %c0_i32_1 = arith.constant 0 : i32
    return %c0_i32, %c0_i32_0 : i32, i32
  }
  func.func @transform_2(%arg0: i32) -> (i32, i32, i32) {
    %c0_i32 = arith.constant 0 : i32
    %c0_i32_0 = arith.constant 0 : i32
    %c0_i32_1 = arith.constant 0 : i32
    return %arg0, %c0_i32, %c0_i32_0 : i32, i32, i32
  }
  func.func @transform_3(%arg0: i32) -> (i32, i32, i32) {
    %c0_i32 = arith.constant 0 : i32
    %c0_i32_0 = arith.constant 0 : i32
    %c0_i32_1 = arith.constant 0 : i32
    return %arg0, %c0_i32, %c0_i32_0 : i32, i32, i32
  }
}

</mosaic_0001>

<llo_original>
// kernel: tpu_custom_call.1
$region0: #{tpu_custom_call.1}
  #allocation0 [shape = 'u32[]', space=smem, size = 0x4, offset = 0x4, fixed_abs, tag = 'smem constant byte address 0x4 - core index']
  #allocation1 [shape = 'u32[144,128]{1,0:T(1,128)}', space=vmem, size = 0x12000, scoped, tag = 'internal scratch']
  %s0 = inlined_call_operand.vmem [shape: f32[2,32], index: 0, kind: input, shape index: {}]
  %s1 = inlined_call_operand.vmem [shape: f32[32,2], index: 1, kind: input, shape index: {}]
  %s2 = inlined_call_operand.hbm [shape: f32[2,32,256], index: 2, kind: input, shape index: {}]
  %s3 = inlined_call_operand.hbm [shape: f32[2,32,256], index: 3, kind: output, shape index: {}]
  %s4 = sld [smem:[#allocation0]]
  $region49: #{tpu_custom_call.1} parent=0
    _
  %s6 = ssub.s32 1, %s4
  %s7 = scalar_select 0, %s6, %s4
  $region1: #{tpu_custom_call.1} parent=0
    #allocation2 [shape = 'u8[65536]{0}', space=vmem, size = 0x10000, scoped, tag = 'input window, operand 2']
    #allocation3 [shape = 's32[2]{0}', space=sflag, size = 0x8, scoped, tag = 'scoped memory for tpu_custom_call.1']
    #allocation4 [shape = 's32[2]{0}', space=sflag, size = 0x8, scoped, tag = 'scoped memory for tpu_custom_call.1']
    #allocation5 [shape = 'u8[65536]{0}', space=vmem, size = 0x10000, scoped, tag = 'output window, operand 0']
    %8 = vsyncpa [#allocation3], 0
    %s9 = scalar_lea.sflag [#allocation3], 1
    %10 = vsyncpa %s9, 0
    %11 = vsyncpa [#allocation4], 0
    %s12 = scalar_lea.sflag [#allocation4], 1
    %13 = vsyncpa %s12, 0
    loop: start=0, step=1, limit=4
    $region2: #{tpu_custom_call.1} parent=1 // loop_pre_header
      _
    $region3: #{tpu_custom_call.1} parent=1 // loop_header
      %s15 = sphi 0, %s19
      %p16 = scmp.ge.s32.totalorder %s15, 4
      %s23 = sphi 0, %s23
      %s25 = sphi 0, %s23
      %s26 = sphi 0, %s25
      %s40 = sphi 0, %s26
      %s44 = sphi 0, %s44
      %s46 = sphi 0, %s44
      %s47 = sphi 0, %s46
      %s61 = sphi 0, %s47
      %s67 = sphi 0, %s69
      %s70 = sphi 0, %s67
      %s71 = sphi 0, %s70
      %s87 = sphi 0, %s71
      %s93 = sphi 0, %s95
      %s96 = sphi 0, %s93
      %s97 = sphi 0, %s96
      %s113 = sphi 0, %s97
    $region4: #{tpu_custom_call.1} parent=1 // loop_header_branch
      %18 = sbr.rel (%p16) target = $region8
    $region5: #{tpu_custom_call.1} parent=1 // loop_body
      %s20 = ssub.s32 %s15, 1
      %s21 = ssub.s32 %s15, 2
      %s22 = sadd.s32 %s15, 1
      %s24 = sadd.s32 %s23, 1
      %p27 = scmp.eq.s32.totalorder %s15, 1
      %p28 = scmp.ne.s32.totalorder %s23, %s25
      %p29 = scmp.eq.s32.totalorder %s15, 0
      %p30 = por %p28, %p29
      %p31 = scmp.ne.s32.totalorder %s23, %s25
      %p32 = scmp.eq.s32.totalorder %s20, 1
      %p33 = por %p31, %p32
      %p34 = scmp.ne.s32.totalorder %s25, %s26
      %p35 = scmp.eq.s32.totalorder %s20, 0
      %p36 = por %p34, %p35
      %p37 = scmp.ne.s32.totalorder %s25, %s26
      %p38 = scmp.eq.s32.totalorder %s21, 1
      %p39 = por %p37, %p38
      %p41 = scmp.ne.s32.totalorder %s26, %s40
      %p42 = scmp.eq.s32.totalorder %s21, 0
      %p43 = por %p41, %p42
      %s45 = sadd.s32 %s44, 1
      %p48 = scmp.eq.s32.totalorder %s15, 1
      %p49 = scmp.ne.s32.totalorder %s44, %s46
      %p50 = scmp.eq.s32.totalorder %s15, 0
      %p51 = por %p49, %p50
      %p52 = scmp.ne.s32.totalorder %s44, %s46
      %p53 = scmp.eq.s32.totalorder %s20, 1
      %p54 = por %p52, %p53
      %p55 = scmp.ne.s32.totalorder %s46, %s47
      %p56 = scmp.eq.s32.totalorder %s20, 0
      %p57 = por %p55, %p56
      %p58 = scmp.ne.s32.totalorder %s46, %s47
      %p59 = scmp.eq.s32.totalorder %s21, 1
      %p60 = por %p58, %p59
      %p62 = scmp.ne.s32.totalorder %s47, %s61
      %p63 = scmp.eq.s32.totalorder %s21, 0
      %p64 = por %p62, %p63
      %s65 = ssub.s32 %s15, %s22
      %p66 = scmp.eq.s32.totalorder %s65, 0
      %s68 = sadd.s32 %s67, 1
      %s69 = scalar_select %p66, %s67, %s68
      %p72 = pneg %p66
      %p73 = scmp.eq.s32.totalorder %s15, 1
      %p74 = por %p72, %p73
      %p75 = scmp.ne.s32.totalorder %s67, %s70
      %p76 = scmp.eq.s32.totalorder %s15, 0
      %p77 = por %p75, %p76
      %p78 = scmp.ne.s32.totalorder %s67, %s70
      %p79 = scmp.eq.s32.totalorder %s20, 1
      %p80 = por %p78, %p79
      %p81 = scmp.ne.s32.totalorder %s70, %s71
      %p82 = scmp.eq.s32.totalorder %s20, 0
      %p83 = por %p81, %p82
      %p84 = scmp.ne.s32.totalorder %s70, %s71
      %p85 = scmp.eq.s32.totalorder %s21, 1
      %p86 = por %p84, %p85
      %p88 = scmp.ne.s32.totalorder %s71, %s87
      %p89 = scmp.eq.s32.totalorder %s21, 0
      %p90 = por %p88, %p89
      %s91 = ssub.s32 %s15, %s22
      %p92 = scmp.eq.s32.totalorder %s91, 0
      %s94 = sadd.s32 %s93, 1
      %s95 = scalar_select %p92, %s93, %s94
      %p98 = pneg %p92
      %p99 = scmp.eq.s32.totalorder %s15, 1
      %p100 = por %p98, %p99
      %p101 = scmp.ne.s32.totalorder %s93, %s96
      %p102 = scmp.eq.s32.totalorder %s15, 0
      %p103 = por %p101, %p102
      %p104 = scmp.ne.s32.totalorder %s93, %s96
      %p105 = scmp.eq.s32.totalorder %s20, 1
      %p106 = por %p104, %p105
      %p107 = scmp.ne.s32.totalorder %s96, %s97
      %p108 = scmp.eq.s32.totalorder %s20, 0
      %p109 = por %p107, %p108
      %p110 = scmp.ne.s32.totalorder %s96, %s97
      %p111 = scmp.eq.s32.totalorder %s21, 1
      %p112 = por %p110, %p111
      %p114 = scmp.ne.s32.totalorder %s97, %s113
      %p115 = scmp.eq.s32.totalorder %s21, 0
      %p116 = por %p114, %p115
      %p117 = scmp.le.s32.totalorder 1, %s15
      %p118 = scmp.lt.s32.totalorder %s15, 3
      %p119 = pnand %p117, %p118
      %p120 = pneg %p119
      // Predicated region
      $region9: #{tpu_custom_call.1} parent=5 // pred_check
        _
      $region10: #{tpu_custom_call.1} parent=5 // pred_check_branch
        %122 = sbr.rel (%p119) target = $region12
      $region11: #{tpu_custom_call.1} parent=5 // pred_region
        %s123 = ssub.s32 %s15, 1
        // Predicated region
        $region13: #{tpu_custom_call.1} parent=11 // pred_check
          %p124 = pneg %p36
        $region14: #{tpu_custom_call.1} parent=11 // pred_check_branch
          %126 = sbr.rel (%p124) target = $region16
        $region15: #{tpu_custom_call.1} parent=11 // pred_region
          _
        $region16: #{tpu_custom_call.1} parent=11 // pred_fallthru
          _
        // Predicated region
        $region17: #{tpu_custom_call.1} parent=11 // pred_check
          %p127 = pneg %p57
        $region18: #{tpu_custom_call.1} parent=11 // pred_check_branch
          %129 = sbr.rel (%p127) target = $region20
        $region19: #{tpu_custom_call.1} parent=11 // pred_region
          _
        $region20: #{tpu_custom_call.1} parent=11 // pred_fallthru
          _
      $region12: #{tpu_custom_call.1} parent=5 // pred_fallthru
        _
      %p130 = scmp.lt.s32.totalorder %s15, 2
      // Predicated region
      $region21: #{tpu_custom_call.1} parent=5 // pred_check
        %p131 = pneg %p130
      $region22: #{tpu_custom_call.1} parent=5 // pred_check_branch
        %133 = sbr.rel (%p131) target = $region24
      $region23: #{tpu_custom_call.1} parent=5 // pred_region
        // Predicated region
        $region25: #{tpu_custom_call.1} parent=23 // pred_check
          %p134 = pneg %p77
        $region26: #{tpu_custom_call.1} parent=23 // pred_check_branch
          %136 = sbr.rel (%p134) target = $region28
        $region27: #{tpu_custom_call.1} parent=23 // pred_region
          %s137 = sand.u32 %s67, 1
          %s138 = scalar_lea.sflag [#allocation3], %s137
          %s139 = sand.u32 %s67, 1
          %s140 = smul.addr %s139, 64
          %s141 = scalar_lea.vmem [#allocation2], %s140
          %s143 = ssub.s32 1024, 1024
          %144 = vsyncadd %s138, %s143
          %s145 = smul.addr %s15, 8
          %s146 = smul.addr %s145, 128
          %s147 = scalar_lea.hbm %s2, %s146
          %s148 = sshll.u32 %s141, 4
          %s149 = int_to_ptr.vmem [resolvable:$true] %s148
          %154 = dma.hbm_to_vmem [thread:$0]  %s147, 1024, %s149, %s138, 256, 256, 16
        $region28: #{tpu_custom_call.1} parent=23 // pred_fallthru
          _
      $region24: #{tpu_custom_call.1} parent=5 // pred_fallthru
        _
      %p155 = scmp.le.s32.totalorder 1, %s15
      %p156 = scmp.lt.s32.totalorder %s15, 3
      %p157 = pnand %p155, %p156
      %p158 = pneg %p157
      // Predicated region
      $region29: #{tpu_custom_call.1} parent=5 // pred_check
        _
      $region30: #{tpu_custom_call.1} parent=5 // pred_check_branch
        %160 = sbr.rel (%p157) target = $region32
      $region31: #{tpu_custom_call.1} parent=5 // pred_region
        %s161 = ssub.s32 %s15, 1
        %s162 = sand.u32 %s70, 1
        %s163 = scalar_lea.sflag [#allocation3], %s162
        %s164 = sand.u32 %s70, 1
        %s165 = smul.addr %s164, 64
        %s166 = scalar_lea.vmem [#allocation2], %s165
        // Predicated region
        $region33: #{tpu_custom_call.1} parent=31 // pred_check
          %p167 = pneg %p83
        $region34: #{tpu_custom_call.1} parent=31 // pred_check_branch
          %169 = sbr.rel (%p167) target = $region36
        $region35: #{tpu_custom_call.1} parent=31 // pred_region
          %170 = dma.done %s163, 1024
        $region36: #{tpu_custom_call.1} parent=31 // pred_fallthru
          _
        %p171 = pneg %p36
        %p172 = pneg %p33
        %p173 = pneg %p57
        %p174 = pneg %p54
        %s175 = sand.u32 %s70, 1
        %s176 = scalar_lea.sflag [#allocation3], %s175
        %s177 = sand.u32 %s70, 1
        %s178 = smul.addr %s177, 64
        %s179 = scalar_lea.vmem [#allocation2], %s178
        %p180 = pneg %p83
        %p181 = pneg %p80
        %p182 = pneg %p109
        %p183 = pneg %p106
        %s184 = sand.u32 %s96, 1
        %s185 = scalar_lea.sflag [#allocation4], %s184
        %s186 = sand.u32 %s96, 1
        %s187 = smul.addr %s186, 64
        %s188 = scalar_lea.vmem [#allocation5], %s187
        %v189 = vld [vmem:[%s166] sm:$0xff]
        %v190 = vld [vmem:[%s166 + $0x8] sm:$0xff]
        %v191 = vld [vmem:[%s166 + $0x10] sm:$0xff]
        %v192 = vld [vmem:[%s166 + $0x18] sm:$0xff]
        %v193 = vld [vmem:[%s166 + $0x20] sm:$0xff]
        %v194 = vld [vmem:[%s166 + $0x28] sm:$0xff]
        %v195 = vld [vmem:[%s166 + $0x30] sm:$0xff]
        %v196 = vld [vmem:[%s166 + $0x38] sm:$0xff]
        %v197 = vadd.f32 %v189, %v190
        %198 = vadd.xlane.f32.xlu0 %v197
        %v199 = vpop.xlane.xlu0 %198
        %v200 = vadd.f32 %v191, %v192
        %201 = vadd.xlane.f32.xlu0 %v200
        %v202 = vpop.xlane.xlu0 %201
        %v203 = vadd.f32 %v193, %v194
        %204 = vadd.xlane.f32.xlu0 %v203
        %v205 = vpop.xlane.xlu0 %204
        %v206 = vadd.f32 %v195, %v196
        %207 = vadd.xlane.f32.xlu0 %v206
        %v208 = vpop.xlane.xlu0 %207
        %v209 = vrcp.pop 256.0
        %v210 = vmul.f32 %v199, %v209
        %v211 = vmul.f32 %v202, %v209
        %v212 = vmul.f32 %v205, %v209
        %v213 = vmul.f32 %v208, %v209
        %v214 = vmax.f32 %v189, %v190
        %215 = vmax.xlane.f32.xlu0 %v214
        %v216 = vpop.xlane.xlu0 %215
        %v217 = vmax.f32 %v191, %v192
        %218 = vmax.xlane.f32.xlu0 %v217
        %v219 = vpop.xlane.xlu0 %218
        %v220 = vmax.f32 %v193, %v194
        %221 = vmax.xlane.f32.xlu0 %v220
        %v222 = vpop.xlane.xlu0 %221
        %v223 = vmax.f32 %v195, %v196
        %224 = vmax.xlane.f32.xlu0 %v223
        %v225 = vpop.xlane.xlu0 %224
        %v226 = vlaneseq
        %v227 = vand.u32 %v226, 127
        %vm228 = vcmp.eq.s32.totalorder %v227, 0
        %v229 = vsel %vm228, %v210, %v216
        %v230 = vsel %vm228, %v211, %v219
        %v231 = vsel %vm228, %v212, %v222
        %v232 = vsel %vm228, %v213, %v225
        %v233 = vld [vmem:[%s0] sm:$0x3]
        %v234 = vld [vmem:[%s1] sm:$0xff]
        %v235 = vld [vmem:[%s1 + $0x8] sm:$0xff]
        %v236 = vld [vmem:[%s1 + $0x10] sm:$0xff]
        %v237 = vld [vmem:[%s1 + $0x18] sm:$0xff]
        %v238 = vlaneseq
        %v239 = vshrl.u32 %v238, 7
        %v240 = vsub.s32 0, %v239
        %v241 = vrot.slane %v233, %v240
        %243 = vbcast.lane.b32.xlu0 %v241, 256
        %v244 = vpop.permute.xlu0 %243
        %s246 = sor.u32 256, 8
        %247 = vbcast.lane.b32.xlu0 %v241, %s246
        %v248 = vpop.permute.xlu0 %247
        %s250 = sor.u32 256, 16
        %251 = vbcast.lane.b32.xlu0 %v241, %s250
        %v252 = vpop.permute.xlu0 %251
        %s254 = sor.u32 256, 24
        %255 = vbcast.lane.b32.xlu0 %v241, %s254
        %v256 = vpop.permute.xlu0 %255
        %v257 = vlaneseq
        %v258 = vshrl.u32 %v257, 7
        %v259 = vsub.s32 1, %v258
        %v260 = vrot.slane %v233, %v259
        %262 = vbcast.lane.b32.xlu0 %v260, 256
        %v263 = vpop.permute.xlu0 %262
        %s265 = sor.u32 256, 8
        %266 = vbcast.lane.b32.xlu0 %v260, %s265
        %v267 = vpop.permute.xlu0 %266
        %s269 = sor.u32 256, 16
        %270 = vbcast.lane.b32.xlu0 %v260, %s269
        %v271 = vpop.permute.xlu0 %270
        %s273 = sor.u32 256, 24
        %274 = vbcast.lane.b32.xlu0 %v260, %s273
        %v275 = vpop.permute.xlu0 %274
        %v276 = vmul.f32 %v244, %v229
        %v277 = vmul.f32 %v248, %v230
        %v278 = vmul.f32 %v252, %v231
        %v279 = vmul.f32 %v256, %v232
        %v280 = vmul.f32 %v263, %v229
        %v281 = vmul.f32 %v267, %v230
        %v282 = vmul.f32 %v271, %v231
        %v283 = vmul.f32 %v275, %v232
        %vm284 = vcmask 15360
        %v285 = vsel %vm284, %v276, 0.0
        %v286 = vsel %vm284, %v277, 0.0
        %v287 = vadd.f32 %v285, %v286
        %v288 = vsel %vm284, %v278, 0.0
        %v289 = vadd.f32 %v287, %v288
        %v290 = vsel %vm284, %v279, 0.0
        %v291 = vadd.f32 %v289, %v290
        %v292 = vrot.slane %v291, 4
        %v293 = vadd.f32 %v291, %v292
        %v294 = vrot.slane %v293, 2
        %v295 = vadd.f32 %v293, %v294
        %v296 = vrot.slane %v295, 1
        %v297 = vadd.f32 %v295, %v296
        %v298 = vsel %vm284, %v280, 0.0
        %v299 = vsel %vm284, %v281, 0.0
        %v300 = vadd.f32 %v298, %v299
        %v301 = vsel %vm284, %v282, 0.0
        %v302 = vadd.f32 %v300, %v301
        %v303 = vsel %vm284, %v283, 0.0
        %v304 = vadd.f32 %v302, %v303
        %v305 = vrot.slane %v304, 4
        %v306 = vadd.f32 %v304, %v305
        %v307 = vrot.slane %v306, 2
        %v308 = vadd.f32 %v306, %v307
        %v309 = vrot.slane %v308, 1
        %v310 = vadd.f32 %v308, %v309
        %v311 = vmax.f32 %v297, 0.0
        %v312 = vmax.f32 %v310, 0.0
        %v313 = vlaneseq
        %v314 = vshrl.u32 %v313, 7
        %v315 = vsub.s32 0, %v314
        %v316 = vrot.slane %v234, %v315
        %318 = vbcast.lane.b32.xlu0 %v316, 256
        %v319 = vpop.permute.xlu0 %318
        %v320 = vlaneseq
        %v321 = vshrl.u32 %v320, 7
        %v322 = vsub.s32 1, %v321
        %v323 = vrot.slane %v234, %v322
        %325 = vbcast.lane.b32.xlu0 %v323, 256
        %v326 = vpop.permute.xlu0 %325
        %v327 = vlaneseq
        %v328 = vshrl.u32 %v327, 7
        %v329 = vsub.s32 2, %v328
        %v330 = vrot.slane %v234, %v329
        %332 = vbcast.lane.b32.xlu0 %v330, 256
        %v333 = vpop.permute.xlu0 %332
        %v334 = vlaneseq
        %v335 = vshrl.u32 %v334, 7
        %v336 = vsub.s32 3, %v335
        %v337 = vrot.slane %v234, %v336
        %339 = vbcast.lane.b32.xlu0 %v337, 256
        %v340 = vpop.permute.xlu0 %339
        %v341 = vlaneseq
        %v342 = vshrl.u32 %v341, 7
        %v343 = vsub.s32 4, %v342
        %v344 = vrot.slane %v234, %v343
        %346 = vbcast.lane.b32.xlu0 %v344, 256
        %v347 = vpop.permute.xlu0 %346
        %v348 = vlaneseq
        %v349 = vshrl.u32 %v348, 7
        %v350 = vsub.s32 5, %v349
        %v351 = vrot.slane %v234, %v350
        %353 = vbcast.lane.b32.xlu0 %v351, 256
        %v354 = vpop.permute.xlu0 %353
        %v355 = vlaneseq
        %v356 = vshrl.u32 %v355, 7
        %v357 = vsub.s32 6, %v356
        %v358 = vrot.slane %v234, %v357
        %360 = vbcast.lane.b32.xlu0 %v358, 256
        %v361 = vpop.permute.xlu0 %360
        %v362 = vlaneseq
        %v363 = vshrl.u32 %v362, 7
        %v364 = vsub.s32 7, %v363
        %v365 = vrot.slane %v234, %v364
        %367 = vbcast.lane.b32.xlu0 %v365, 256
        %v368 = vpop.permute.xlu0 %367
        %v369 = vlaneseq
        %v370 = vshrl.u32 %v369, 7
        %v371 = vsub.s32 0, %v370
        %v372 = vrot.slane %v235, %v371
        %374 = vbcast.lane.b32.xlu0 %v372, 256
        %v375 = vpop.permute.xlu0 %374
        %v376 = vlaneseq
        %v377 = vshrl.u32 %v376, 7
        %v378 = vsub.s32 1, %v377
        %v379 = vrot.slane %v235, %v378
        %381 = vbcast.lane.b32.xlu0 %v379, 256
        %v382 = vpop.permute.xlu0 %381
        %v383 = vlaneseq
        %v384 = vshrl.u32 %v383, 7
        %v385 = vsub.s32 2, %v384
        %v386 = vrot.slane %v235, %v385
        %388 = vbcast.lane.b32.xlu0 %v386, 256
        %v389 = vpop.permute.xlu0 %388
        %v390 = vlaneseq
        %v391 = vshrl.u32 %v390, 7
        %v392 = vsub.s32 3, %v391
        %v393 = vrot.slane %v235, %v392
        %395 = vbcast.lane.b32.xlu0 %v393, 256
        %v396 = vpop.permute.xlu0 %395
        %v397 = vlaneseq
        %v398 = vshrl.u32 %v397, 7
        %v399 = vsub.s32 4, %v398
        %v400 = vrot.slane %v235, %v399
        %402 = vbcast.lane.b32.xlu0 %v400, 256
        %v403 = vpop.permute.xlu0 %402
        %v404 = vlaneseq
        %v405 = vshrl.u32 %v404, 7
        %v406 = vsub.s32 5, %v405
        %v407 = vrot.slane %v235, %v406
        %409 = vbcast.lane.b32.xlu0 %v407, 256
        %v410 = vpop.permute.xlu0 %409
        %v411 = vlaneseq
        %v412 = vshrl.u32 %v411, 7
        %v413 = vsub.s32 6, %v412
        %v414 = vrot.slane %v235, %v413
        %416 = vbcast.lane.b32.xlu0 %v414, 256
        %v417 = vpop.permute.xlu0 %416
        %v418 = vlaneseq
        %v419 = vshrl.u32 %v418, 7
        %v420 = vsub.s32 7, %v419
        %v421 = vrot.slane %v235, %v420
        %423 = vbcast.lane.b32.xlu0 %v421, 256
        %v424 = vpop.permute.xlu0 %423
        %v425 = vlaneseq
        %v426 = vshrl.u32 %v425, 7
        %v427 = vsub.s32 0, %v426
        %v428 = vrot.slane %v236, %v427
        %430 = vbcast.lane.b32.xlu0 %v428, 256
        %v431 = vpop.permute.xlu0 %430
        %v432 = vlaneseq
        %v433 = vshrl.u32 %v432, 7
        %v434 = vsub.s32 1, %v433
        %v435 = vrot.slane %v236, %v434
        %437 = vbcast.lane.b32.xlu0 %v435, 256
        %v438 = vpop.permute.xlu0 %437
        %v439 = vlaneseq
        %v440 = vshrl.u32 %v439, 7
        %v441 = vsub.s32 2, %v440
        %v442 = vrot.slane %v236, %v441
        %444 = vbcast.lane.b32.xlu0 %v442, 256
        %v445 = vpop.permute.xlu0 %444
        %v446 = vlaneseq
        %v447 = vshrl.u32 %v446, 7
        %v448 = vsub.s32 3, %v447
        %v449 = vrot.slane %v236, %v448
        %451 = vbcast.lane.b32.xlu0 %v449, 256
        %v452 = vpop.permute.xlu0 %451
        %v453 = vlaneseq
        %v454 = vshrl.u32 %v453, 7
        %v455 = vsub.s32 4, %v454
        %v456 = vrot.slane %v236, %v455
        %458 = vbcast.lane.b32.xlu0 %v456, 256
        %v459 = vpop.permute.xlu0 %458
        %v460 = vlaneseq
        %v461 = vshrl.u32 %v460, 7
        %v462 = vsub.s32 5, %v461
        %v463 = vrot.slane %v236, %v462
        %465 = vbcast.lane.b32.xlu0 %v463, 256
        %v466 = vpop.permute.xlu0 %465
        %v467 = vlaneseq
        %v468 = vshrl.u32 %v467, 7
        %v469 = vsub.s32 6, %v468
        %v470 = vrot.slane %v236, %v469
        %472 = vbcast.lane.b32.xlu0 %v470, 256
        %v473 = vpop.permute.xlu0 %472
        %v474 = vlaneseq
        %v475 = vshrl.u32 %v474, 7
        %v476 = vsub.s32 7, %v475
        %v477 = vrot.slane %v236, %v476
        %479 = vbcast.lane.b32.xlu0 %v477, 256
        %v480 = vpop.permute.xlu0 %479
        %v481 = vlaneseq
        %v482 = vshrl.u32 %v481, 7
        %v483 = vsub.s32 0, %v482
        %v484 = vrot.slane %v237, %v483
        %486 = vbcast.lane.b32.xlu0 %v484, 256
        %v487 = vpop.permute.xlu0 %486
        %v488 = vlaneseq
        %v489 = vshrl.u32 %v488, 7
        %v490 = vsub.s32 1, %v489
        %v491 = vrot.slane %v237, %v490
        %493 = vbcast.lane.b32.xlu0 %v491, 256
        %v494 = vpop.permute.xlu0 %493
        %v495 = vlaneseq
        %v496 = vshrl.u32 %v495, 7
        %v497 = vsub.s32 2, %v496
        %v498 = vrot.slane %v237, %v497
        %500 = vbcast.lane.b32.xlu0 %v498, 256
        %v501 = vpop.permute.xlu0 %500
        %v502 = vlaneseq
        %v503 = vshrl.u32 %v502, 7
        %v504 = vsub.s32 3, %v503
        %v505 = vrot.slane %v237, %v504
        %507 = vbcast.lane.b32.xlu0 %v505, 256
        %v508 = vpop.permute.xlu0 %507
        %v509 = vlaneseq
        %v510 = vshrl.u32 %v509, 7
        %v511 = vsub.s32 4, %v510
        %v512 = vrot.slane %v237, %v511
        %514 = vbcast.lane.b32.xlu0 %v512, 256
        %v515 = vpop.permute.xlu0 %514
        %v516 = vlaneseq
        %v517 = vshrl.u32 %v516, 7
        %v518 = vsub.s32 5, %v517
        %v519 = vrot.slane %v237, %v518
        %521 = vbcast.lane.b32.xlu0 %v519, 256
        %v522 = vpop.permute.xlu0 %521
        %v523 = vlaneseq
        %v524 = vshrl.u32 %v523, 7
        %v525 = vsub.s32 6, %v524
        %v526 = vrot.slane %v237, %v525
        %528 = vbcast.lane.b32.xlu0 %v526, 256
        %v529 = vpop.permute.xlu0 %528
        %v530 = vlaneseq
        %v531 = vshrl.u32 %v530, 7
        %v532 = vsub.s32 7, %v531
        %v533 = vrot.slane %v237, %v532
        %535 = vbcast.lane.b32.xlu0 %v533, 256
        %v536 = vpop.permute.xlu0 %535
        %vm539 = vcmask 1041409
        %v540 = vsel %vm539, %v312, %v311
        %v542 = vmul.f32 %v319, %v540
        %v543 = vmul.f32 %v326, %v540
        %v544 = vmul.f32 %v333, %v540
        %v545 = vmul.f32 %v340, %v540
        %v546 = vmul.f32 %v347, %v540
        %v547 = vmul.f32 %v354, %v540
        %v548 = vmul.f32 %v361, %v540
        %v549 = vmul.f32 %v368, %v540
        %v550 = vmul.f32 %v375, %v540
        %v551 = vmul.f32 %v382, %v540
        %v552 = vmul.f32 %v389, %v540
        %v553 = vmul.f32 %v396, %v540
        %v554 = vmul.f32 %v403, %v540
        %v555 = vmul.f32 %v410, %v540
        %v556 = vmul.f32 %v417, %v540
        %v557 = vmul.f32 %v424, %v540
        %v558 = vmul.f32 %v431, %v540
        %v559 = vmul.f32 %v438, %v540
        %v560 = vmul.f32 %v445, %v540
        %v561 = vmul.f32 %v452, %v540
        %v562 = vmul.f32 %v459, %v540
        %v563 = vmul.f32 %v466, %v540
        %v564 = vmul.f32 %v473, %v540
        %v565 = vmul.f32 %v480, %v540
        %v566 = vmul.f32 %v487, %v540
        %v567 = vmul.f32 %v494, %v540
        %v568 = vmul.f32 %v501, %v540
        %v569 = vmul.f32 %v508, %v540
        %v570 = vmul.f32 %v515, %v540
        %v571 = vmul.f32 %v522, %v540
        %v572 = vmul.f32 %v529, %v540
        %v573 = vmul.f32 %v536, %v540
        %vm574 = vcmask 9216
        %v575 = vsel %vm574, %v542, 0.0
        %v576 = vrot.slane %v575, 4
        %v577 = vadd.f32 %v575, %v576
        %v578 = vrot.slane %v577, 2
        %v579 = vadd.f32 %v577, %v578
        %v580 = vrot.slane %v579, 1
        %v581 = vadd.f32 %v579, %v580
        %v582 = vsel %vm574, %v543, 0.0
        %v583 = vrot.slane %v582, 4
        %v584 = vadd.f32 %v582, %v583
        %v585 = vrot.slane %v584, 2
        %v586 = vadd.f32 %v584, %v585
        %v587 = vrot.slane %v586, 1
        %v588 = vadd.f32 %v586, %v587
        %v589 = vsel %vm574, %v544, 0.0
        %v590 = vrot.slane %v589, 4
        %v591 = vadd.f32 %v589, %v590
        %v592 = vrot.slane %v591, 2
        %v593 = vadd.f32 %v591, %v592
        %v594 = vrot.slane %v593, 1
        %v595 = vadd.f32 %v593, %v594
        %v596 = vsel %vm574, %v545, 0.0
        %v597 = vrot.slane %v596, 4
        %v598 = vadd.f32 %v596, %v597
        %v599 = vrot.slane %v598, 2
        %v600 = vadd.f32 %v598, %v599
        %v601 = vrot.slane %v600, 1
        %v602 = vadd.f32 %v600, %v601
        %v603 = vsel %vm574, %v546, 0.0
        %v604 = vrot.slane %v603, 4
        %v605 = vadd.f32 %v603, %v604
        %v606 = vrot.slane %v605, 2
        %v607 = vadd.f32 %v605, %v606
        %v608 = vrot.slane %v607, 1
        %v609 = vadd.f32 %v607, %v608
        %v610 = vsel %vm574, %v547, 0.0
        %v611 = vrot.slane %v610, 4
        %v612 = vadd.f32 %v610, %v611
        %v613 = vrot.slane %v612, 2
        %v614 = vadd.f32 %v612, %v613
        %v615 = vrot.slane %v614, 1
        %v616 = vadd.f32 %v614, %v615
        %v617 = vsel %vm574, %v548, 0.0
        %v618 = vrot.slane %v617, 4
        %v619 = vadd.f32 %v617, %v618
        %v620 = vrot.slane %v619, 2
        %v621 = vadd.f32 %v619, %v620
        %v622 = vrot.slane %v621, 1
        %v623 = vadd.f32 %v621, %v622
        %v624 = vsel %vm574, %v549, 0.0
        %v625 = vrot.slane %v624, 4
        %v626 = vadd.f32 %v624, %v625
        %v627 = vrot.slane %v626, 2
        %v628 = vadd.f32 %v626, %v627
        %v629 = vrot.slane %v628, 1
        %v630 = vadd.f32 %v628, %v629
        %v631 = vsel %vm574, %v550, 0.0
        %v632 = vrot.slane %v631, 4
        %v633 = vadd.f32 %v631, %v632
        %v634 = vrot.slane %v633, 2
        %v635 = vadd.f32 %v633, %v634
        %v636 = vrot.slane %v635, 1
        %v637 = vadd.f32 %v635, %v636
        %v638 = vsel %vm574, %v551, 0.0
        %v639 = vrot.slane %v638, 4
        %v640 = vadd.f32 %v638, %v639
        %v641 = vrot.slane %v640, 2
        %v642 = vadd.f32 %v640, %v641
        %v643 = vrot.slane %v642, 1
        %v644 = vadd.f32 %v642, %v643
        %v645 = vsel %vm574, %v552, 0.0
        %v646 = vrot.slane %v645, 4
        %v647 = vadd.f32 %v645, %v646
        %v648 = vrot.slane %v647, 2
        %v649 = vadd.f32 %v647, %v648
        %v650 = vrot.slane %v649, 1
        %v651 = vadd.f32 %v649, %v650
        %v652 = vsel %vm574, %v553, 0.0
        %v653 = vrot.slane %v652, 4
        %v654 = vadd.f32 %v652, %v653
        %v655 = vrot.slane %v654, 2
        %v656 = vadd.f32 %v654, %v655
        %v657 = vrot.slane %v656, 1
        %v658 = vadd.f32 %v656, %v657
        %v659 = vsel %vm574, %v554, 0.0
        %v660 = vrot.slane %v659, 4
        %v661 = vadd.f32 %v659, %v660
        %v662 = vrot.slane %v661, 2
        %v663 = vadd.f32 %v661, %v662
        %v664 = vrot.slane %v663, 1
        %v665 = vadd.f32 %v663, %v664
        %v666 = vsel %vm574, %v555, 0.0
        %v667 = vrot.slane %v666, 4
        %v668 = vadd.f32 %v666, %v667
        %v669 = vrot.slane %v668, 2
        %v670 = vadd.f32 %v668, %v669
        %v671 = vrot.slane %v670, 1
        %v672 = vadd.f32 %v670, %v671
        %v673 = vsel %vm574, %v556, 0.0
        %v674 = vrot.slane %v673, 4
        %v675 = vadd.f32 %v673, %v674
        %v676 = vrot.slane %v675, 2
        %v677 = vadd.f32 %v675, %v676
        %v678 = vrot.slane %v677, 1
        %v679 = vadd.f32 %v677, %v678
        %v680 = vsel %vm574, %v557, 0.0
        %v681 = vrot.slane %v680, 4
        %v682 = vadd.f32 %v680, %v681
        %v683 = vrot.slane %v682, 2
        %v684 = vadd.f32 %v682, %v683
        %v685 = vrot.slane %v684, 1
        %v686 = vadd.f32 %v684, %v685
        %v687 = vsel %vm574, %v558, 0.0
        %v688 = vrot.slane %v687, 4
        %v689 = vadd.f32 %v687, %v688
        %v690 = vrot.slane %v689, 2
        %v691 = vadd.f32 %v689, %v690
        %v692 = vrot.slane %v691, 1
        %v693 = vadd.f32 %v691, %v692
        %v694 = vsel %vm574, %v559, 0.0
        %v695 = vrot.slane %v694, 4
        %v696 = vadd.f32 %v694, %v695
        %v697 = vrot.slane %v696, 2
        %v698 = vadd.f32 %v696, %v697
        %v699 = vrot.slane %v698, 1
        %v700 = vadd.f32 %v698, %v699
        %v701 = vsel %vm574, %v560, 0.0
        %v702 = vrot.slane %v701, 4
        %v703 = vadd.f32 %v701, %v702
        %v704 = vrot.slane %v703, 2
        %v705 = vadd.f32 %v703, %v704
        %v706 = vrot.slane %v705, 1
        %v707 = vadd.f32 %v705, %v706
        %v708 = vsel %vm574, %v561, 0.0
        %v709 = vrot.slane %v708, 4
        %v710 = vadd.f32 %v708, %v709
        %v711 = vrot.slane %v710, 2
        %v712 = vadd.f32 %v710, %v711
        %v713 = vrot.slane %v712, 1
        %v714 = vadd.f32 %v712, %v713
        %v715 = vsel %vm574, %v562, 0.0
        %v716 = vrot.slane %v715, 4
        %v717 = vadd.f32 %v715, %v716
        %v718 = vrot.slane %v717, 2
        %v719 = vadd.f32 %v717, %v718
        %v720 = vrot.slane %v719, 1
        %v721 = vadd.f32 %v719, %v720
        %v722 = vsel %vm574, %v563, 0.0
        %v723 = vrot.slane %v722, 4
        %v724 = vadd.f32 %v722, %v723
        %v725 = vrot.slane %v724, 2
        %v726 = vadd.f32 %v724, %v725
        %v727 = vrot.slane %v726, 1
        %v728 = vadd.f32 %v726, %v727
        %v729 = vsel %vm574, %v564, 0.0
        %v730 = vrot.slane %v729, 4
        %v731 = vadd.f32 %v729, %v730
        %v732 = vrot.slane %v731, 2
        %v733 = vadd.f32 %v731, %v732
        %v734 = vrot.slane %v733, 1
        %v735 = vadd.f32 %v733, %v734
        %v736 = vsel %vm574, %v565, 0.0
        %v737 = vrot.slane %v736, 4
        %v738 = vadd.f32 %v736, %v737
        %v739 = vrot.slane %v738, 2
        %v740 = vadd.f32 %v738, %v739
        %v741 = vrot.slane %v740, 1
        %v742 = vadd.f32 %v740, %v741
        %v743 = vsel %vm574, %v566, 0.0
        %v744 = vrot.slane %v743, 4
        %v745 = vadd.f32 %v743, %v744
        %v746 = vrot.slane %v745, 2
        %v747 = vadd.f32 %v745, %v746
        %v748 = vrot.slane %v747, 1
        %v749 = vadd.f32 %v747, %v748
        %v750 = vsel %vm574, %v567, 0.0
        %v751 = vrot.slane %v750, 4
        %v752 = vadd.f32 %v750, %v751
        %v753 = vrot.slane %v752, 2
        %v754 = vadd.f32 %v752, %v753
        %v755 = vrot.slane %v754, 1
        %v756 = vadd.f32 %v754, %v755
        %v757 = vsel %vm574, %v568, 0.0
        %v758 = vrot.slane %v757, 4
        %v759 = vadd.f32 %v757, %v758
        %v760 = vrot.slane %v759, 2
        %v761 = vadd.f32 %v759, %v760
        %v762 = vrot.slane %v761, 1
        %v763 = vadd.f32 %v761, %v762
        %v764 = vsel %vm574, %v569, 0.0
        %v765 = vrot.slane %v764, 4
        %v766 = vadd.f32 %v764, %v765
        %v767 = vrot.slane %v766, 2
        %v768 = vadd.f32 %v766, %v767
        %v769 = vrot.slane %v768, 1
        %v770 = vadd.f32 %v768, %v769
        %v771 = vsel %vm574, %v570, 0.0
        %v772 = vrot.slane %v771, 4
        %v773 = vadd.f32 %v771, %v772
        %v774 = vrot.slane %v773, 2
        %v775 = vadd.f32 %v773, %v774
        %v776 = vrot.slane %v775, 1
        %v777 = vadd.f32 %v775, %v776
        %v778 = vsel %vm574, %v571, 0.0
        %v779 = vrot.slane %v778, 4
        %v780 = vadd.f32 %v778, %v779
        %v781 = vrot.slane %v780, 2
        %v782 = vadd.f32 %v780, %v781
        %v783 = vrot.slane %v782, 1
        %v784 = vadd.f32 %v782, %v783
        %v785 = vsel %vm574, %v572, 0.0
        %v786 = vrot.slane %v785, 4
        %v787 = vadd.f32 %v785, %v786
        %v788 = vrot.slane %v787, 2
        %v789 = vadd.f32 %v787, %v788
        %v790 = vrot.slane %v789, 1
        %v791 = vadd.f32 %v789, %v790
        %v792 = vsel %vm574, %v573, 0.0
        %v793 = vrot.slane %v792, 4
        %v794 = vadd.f32 %v792, %v793
        %v795 = vrot.slane %v794, 2
        %v796 = vadd.f32 %v794, %v795
        %v797 = vrot.slane %v796, 1
        %v798 = vadd.f32 %v796, %v797
        %v831 = vsel %vm539, %v588, %v581
        %vm832 = vcmask 1042434
        %v833 = vsel %vm832, %v595, %v831
        %vm834 = vcmask 1043459
        %v835 = vsel %vm834, %v602, %v833
        %vm836 = vcmask 1044484
        %v837 = vsel %vm836, %v609, %v835
        %vm838 = vcmask 1045509
        %v839 = vsel %vm838, %v616, %v837
        %vm840 = vcmask 1046534
        %v841 = vsel %vm840, %v623, %v839
        %vm842 = vcmask 1047559
        %v843 = vsel %vm842, %v630, %v841
        %v844 = vsel %vm539, %v644, %v637
        %v845 = vsel %vm832, %v651, %v844
        %v846 = vsel %vm834, %v658, %v845
        %v847 = vsel %vm836, %v665, %v846
        %v848 = vsel %vm838, %v672, %v847
        %v849 = vsel %vm840, %v679, %v848
        %v850 = vsel %vm842, %v686, %v849
        %v851 = vsel %vm539, %v700, %v693
        %v852 = vsel %vm832, %v707, %v851
        %v853 = vsel %vm834, %v714, %v852
        %v854 = vsel %vm836, %v721, %v853
        %v855 = vsel %vm838, %v728, %v854
        %v856 = vsel %vm840, %v735, %v855
        %v857 = vsel %vm842, %v742, %v856
        %v858 = vsel %vm539, %v756, %v749
        %v859 = vsel %vm832, %v763, %v858
        %v860 = vsel %vm834, %v770, %v859
        %v861 = vsel %vm836, %v777, %v860
        %v862 = vsel %vm838, %v784, %v861
        %v863 = vsel %vm840, %v791, %v862
        %v864 = vsel %vm842, %v798, %v863
        %v869 = vsel %vm284, %v843, 0.0
        %870 = vadd.xlane.f32.xlu0 %v869
        %v871 = vpop.xlane.xlu0 %870
        %v872 = vsel %vm284, %v850, 0.0
        %873 = vadd.xlane.f32.xlu0 %v872
        %v874 = vpop.xlane.xlu0 %873
        %v875 = vsel %vm284, %v857, 0.0
        %876 = vadd.xlane.f32.xlu0 %v875
        %v877 = vpop.xlane.xlu0 %876
        %v878 = vsel %vm284, %v864, 0.0
        %879 = vadd.xlane.f32.xlu0 %v878
        %v880 = vpop.xlane.xlu0 %879
        %v881 = vxor.u32 %v871, 2147483648
        %v882 = vxor.u32 %v874, 2147483648
        %v883 = vxor.u32 %v877, 2147483648
        %v884 = vxor.u32 %v880, 2147483648
        %v885 = vmul.f32 %v881, 1.442695
        %v886 = vpow.pop %v885
        %v887 = vmul.f32 %v882, 1.442695
        %v888 = vpow.pop %v887
        %v889 = vmul.f32 %v883, 1.442695
        %v890 = vpow.pop %v889
        %v891 = vmul.f32 %v884, 1.442695
        %v892 = vpow.pop %v891
        %v893 = vadd.f32 %v886, 1.0
        %v894 = vadd.f32 %v888, 1.0
        %v895 = vadd.f32 %v890, 1.0
        %v896 = vadd.f32 %v892, 1.0
        %v897 = vrcp.pop %v893
        %v898 = vmul.f32 1.0, %v897
        %v899 = vrcp.pop %v894
        %v900 = vmul.f32 1.0, %v899
        %v901 = vrcp.pop %v895
        %v902 = vmul.f32 1.0, %v901
        %v903 = vrcp.pop %v896
        %v904 = vmul.f32 1.0, %v903
        %v905 = vmul.f32 %v189, %v898
        %v906 = vmul.f32 %v190, %v898
        %v907 = vmul.f32 %v191, %v900
        %v908 = vmul.f32 %v192, %v900
        %v909 = vmul.f32 %v193, %v902
        %v910 = vmul.f32 %v194, %v902
        %v911 = vmul.f32 %v195, %v904
        %v912 = vmul.f32 %v196, %v904
        %913 = vst [vmem:[%s188] sm:$0xff] %v905
        %914 = vst [vmem:[%s188 + $0x8] sm:$0xff] %v906
        %915 = vst [vmem:[%s188 + $0x10] sm:$0xff] %v907
        %916 = vst [vmem:[%s188 + $0x18] sm:$0xff] %v908
        %917 = vst [vmem:[%s188 + $0x20] sm:$0xff] %v909
        %918 = vst [vmem:[%s188 + $0x28] sm:$0xff] %v910
        %919 = vst [vmem:[%s188 + $0x30] sm:$0xff] %v911
        %920 = vst [vmem:[%s188 + $0x38] sm:$0xff] %v912
        %s921 = sand.u32 %s96, 1
        %s922 = scalar_lea.sflag [#allocation4], %s921
        %s923 = sand.u32 %s96, 1
        %s924 = smul.addr %s923, 64
        %s925 = scalar_lea.vmem [#allocation5], %s924
        // Predicated region
        $region37: #{tpu_custom_call.1} parent=31 // pred_check
          %p926 = pneg %p106
        $region38: #{tpu_custom_call.1} parent=31 // pred_check_branch
          %928 = sbr.rel (%p926) target = $region40
        $region39: #{tpu_custom_call.1} parent=31 // pred_region
          %s930 = ssub.s32 1024, 1024
          %931 = vsyncadd %s922, %s930
          %s932 = smul.addr %s20, 8
          %s933 = smul.addr %s932, 128
          %s934 = scalar_lea.hbm %s3, %s933
          %s935 = sshll.u32 %s925, 4
          %s936 = int_to_ptr.vmem [resolvable:$true] %s935
          %941 = dma.vmem_to_hbm [thread:$0]  %s936, 1024, %s934, %s922, 256, 256, 16
        $region40: #{tpu_custom_call.1} parent=31 // pred_fallthru
          _
      $region32: #{tpu_custom_call.1} parent=5 // pred_fallthru
        _
      %p942 = scmp.le.s32.totalorder 2, %s15
      // Predicated region
      $region41: #{tpu_custom_call.1} parent=5 // pred_check
        %p943 = pneg %p942
      $region42: #{tpu_custom_call.1} parent=5 // pred_check_branch
        %945 = sbr.rel (%p943) target = $region44
      $region43: #{tpu_custom_call.1} parent=5 // pred_region
        %s946 = ssub.s32 %s15, 2
        // Predicated region
        $region45: #{tpu_custom_call.1} parent=43 // pred_check
          %p947 = pneg %p112
        $region46: #{tpu_custom_call.1} parent=43 // pred_check_branch
          %949 = sbr.rel (%p947) target = $region48
        $region47: #{tpu_custom_call.1} parent=43 // pred_region
          %s950 = sand.u32 %s97, 1
          %s951 = scalar_lea.sflag [#allocation4], %s950
          %s952 = sand.u32 %s97, 1
          %s953 = smul.addr %s952, 64
          %s954 = scalar_lea.vmem [#allocation5], %s953
          %955 = dma.done %s951, 1024
        $region48: #{tpu_custom_call.1} parent=43 // pred_fallthru
          _
      $region44: #{tpu_custom_call.1} parent=5 // pred_fallthru
        _
    $region6: #{tpu_custom_call.1} parent=1 // loop_footer
      %s19 = sadd.s32 1, %s15
    $region7: #{tpu_custom_call.1} parent=1 // loop_footer_branch
      %14 = sbr.rel target = $region3
    $region8: #{tpu_custom_call.1} parent=1 // loop_exit
      _
    %956 = vsyncpa [#allocation3], 1
    %s957 = scalar_lea.sflag [#allocation3], 1
    %958 = vsyncpa %s957, 1
    %959 = vsyncpa [#allocation4], 1
    %s960 = scalar_lea.sflag [#allocation4], 1
    %961 = vsyncpa %s960, 1

</llo_original>
